<compile_context>
chip_gen: v7x
topology: tpu7x:2x2x1
jax: 0.10.0
libtpu: 0.0.40
codegen_flags: <defaults>
</compile_context>

<pallas_src>
import functools

import jax
import jax.numpy as jnp
import numpy as np
from jax.experimental import pallas as pl
from jax.experimental.pallas import tpu as pltpu


# ----------------------------------------------------------------------------
# Pallas kernels
# ----------------------------------------------------------------------------
def _conv_fused_kernel(p_ref, w_ref, b_ref, *rest, epi, epi_relu, has_res):
    """Fused conv step for one batch element.

    p_ref : (1, L, K)   im2col patches, K = Kh*Kw*Cin (taps folded into K)
    w_ref : (K, Cout)   weights
    b_ref : (1, Cout)   bias
    rest  : optional [epi_scale (1,Cout), epi_shift (1,Cout)],
            optional [residual (1, L, Cout)], then o_ref (1, L, Cout).
    """
    o_ref = rest[-1]
    extras = rest[:-1]
    acc = jnp.dot(p_ref[0], w_ref[...], preferred_element_type=jnp.float32)
    acc = acc + b_ref[0]
    i = 0
    if epi:                       # folded BatchNorm (eval mode) epilogue
        acc = acc * extras[i][0] + extras[i + 1][0]
        i += 2
    if epi_relu:
        acc = jnp.maximum(acc, 0.0)
    if has_res:                   # fused residual add
        acc = acc + extras[i][0]
        i += 1
    o_ref[0] = acc.astype(o_ref.dtype)


def conv2d_fused(x, w, b, stride=1, padding=0, *, epi_scale=None,
                 epi_shift=None, epi_relu=False, residual=None):
    """2D conv with optional fused per-channel affine epilogue / ReLU / residual.

    x:(N,H,W,Cin) NHWC, w:(Kh,Kw,Cin,Cout), b:(Cout,).  Returns (N,Ho,Wo,Cout).
    """
    N, H, W, Cin = x.shape
    Kh, Kw, _, Cout = w.shape
    Ho = (H + 2 * padding - Kh) // stride + 1
    Wo = (W + 2 * padding - Kw) // stride + 1
    L = Ho * Wo
    K = Kh * Kw * Cin

    xp = jnp.pad(x, ((0, 0), (padding, padding), (padding, padding), (0, 0)))
    cols = []
    for kh in range(Kh):
        for kw in range(Kw):
            sl = xp[:, kh:kh + (Ho - 1) * stride + 1:stride,
                    kw:kw + (Wo - 1) * stride + 1:stride, :]
            cols.append(sl.reshape(N, L, Cin))
    patches = cols[0] if len(cols) == 1 else jnp.concatenate(cols, axis=-1)
    w2 = w.reshape(K, Cout)
    b2 = b.reshape(1, Cout)

    epi = epi_scale is not None
    has_res = residual is not None

    in_specs = [
        pl.BlockSpec((1, L, K), lambda n: (n, 0, 0)),
        pl.BlockSpec((K, Cout), lambda n: (0, 0)),
        pl.BlockSpec((1, Cout), lambda n: (0, 0)),
    ]
    args = [patches, w2, b2]
    if epi:
        in_specs += [pl.BlockSpec((1, Cout), lambda n: (0, 0)),
                     pl.BlockSpec((1, Cout), lambda n: (0, 0))]
        args += [epi_scale.reshape(1, Cout), epi_shift.reshape(1, Cout)]
    if has_res:
        in_specs.append(pl.BlockSpec((1, L, Cout), lambda n: (n, 0, 0)))
        args.append(residual.reshape(N, L, Cout))

    out = pl.pallas_call(
        functools.partial(_conv_fused_kernel, epi=epi, epi_relu=epi_relu,
                          has_res=has_res),
        out_shape=jax.ShapeDtypeStruct((N, L, Cout), x.dtype),
        grid_spec=pltpu.PrefetchScalarGridSpec(
            num_scalar_prefetch=0,
            grid=(N,),
            in_specs=in_specs,
            out_specs=pl.BlockSpec((1, L, Cout), lambda n: (n, 0, 0)),
        ),
        compiler_params=pltpu.CompilerParams(
            dimension_semantics=("parallel",)),
    )(*args)
    return out.reshape(N, Ho, Wo, Cout)


def _affine_relu_kernel(x_ref, s_ref, t_ref, o_ref):
    o_ref[...] = jnp.maximum(x_ref[...] * s_ref[...] + t_ref[...],
                             0.0).astype(o_ref.dtype)


def preact_bn_relu(x, scale, shift):
    """Pre-activation eval-mode BatchNorm + ReLU.

    Runs as a single lane-dense block: the NHWC tensor is flattened to
    (total/128, 128) (C divides 128), with the per-channel scale/shift tiled
    along the lane axis, so no masked partial loads/stores and one launch."""
    N, H, W, C = x.shape
    total = N * H * W * C
    if C <= 128 and 128 % C == 0 and total % 128 == 0:
        lanes = 128
        x2 = x.reshape(total // lanes, lanes)
        s2 = jnp.tile(scale, lanes // C).reshape(1, lanes)
        t2 = jnp.tile(shift, lanes // C).reshape(1, lanes)
    else:  # fallback layout (still a single block)
        x2 = x.reshape(N * H * W, C)
        s2 = scale.reshape(1, C)
        t2 = shift.reshape(1, C)
    out = pl.pallas_call(
        _affine_relu_kernel,
        out_shape=jax.ShapeDtypeStruct(x2.shape, x.dtype),
    )(x2, s2, t2)
    return out.reshape(N, H, W, C)


def _upsample_nchw_kernel(y_ref, ry_ref, rxt_ref, o_ref):
    """Separable bilinear upsample, output written directly in NCHW.

    y_ref:(1,C,H,W)  ry_ref:(Ho,H)  rxt_ref:(W,Wo)  o_ref:(1,C,Ho,Wo)."""
    for c in range(y_ref.shape[1]):                    # static unroll, small C
        rows = jnp.dot(ry_ref[...], y_ref[0, c],
                       preferred_element_type=jnp.float32)        # (Ho, W)
        o_ref[0, c] = jnp.dot(rows, rxt_ref[...],
                              preferred_element_type=jnp.float32
                              ).astype(o_ref.dtype)


def upsample_nchw_pallas(y_nchw, size):
    """align_corners=True bilinear upsample of an NCHW tensor via two MXU
    matmuls per channel; output stays NCHW so the lane dim is Wo (lane-dense)."""
    N, C, H, W = y_nchw.shape
    Ho, Wo = size
    ry = _interp_matrix(H, Ho)          # (Ho, H)
    rxt = _interp_matrix(W, Wo).T       # (W, Wo)
    return pl.pallas_call(
        _upsample_nchw_kernel,
        out_shape=jax.ShapeDtypeStruct((N, C, Ho, Wo), y_nchw.dtype),
        grid_spec=pltpu.PrefetchScalarGridSpec(
            num_scalar_prefetch=0,
            grid=(N,),
            in_specs=[pl.BlockSpec((1, C, H, W), lambda n: (n, 0, 0, 0)),
                      pl.BlockSpec((Ho, H), lambda n: (0, 0)),
                      pl.BlockSpec((W, Wo), lambda n: (0, 0))],
            out_specs=pl.BlockSpec((1, C, Ho, Wo), lambda n: (n, 0, 0, 0)),
        ),
        compiler_params=pltpu.CompilerParams(
            dimension_semantics=("parallel",)),
    )(y_nchw, ry, rxt)


# ----------------------------------------------------------------------------
# Glue: interpolation matrices & small decoder upsamples (separable matmuls)
# ----------------------------------------------------------------------------
def _interp_matrix(in_size, out_size):
    """Dense (out, in) align_corners=True bilinear interpolation matrix
    (built with numpy at trace time -> becomes a constant)."""
    R = np.zeros((out_size, in_size), dtype=np.float32)
    if out_size == 1:
        R[0, 0] = 1.0
        return jnp.asarray(R)
    pos = np.arange(out_size, dtype=np.float64) * ((in_size - 1) / (out_size - 1))
    lo = np.clip(np.floor(pos).astype(np.int64), 0, in_size - 1)
    hi = np.minimum(lo + 1, in_size - 1)
    frac = (pos - lo).astype(np.float32)
    np.add.at(R, (np.arange(out_size), lo), 1.0 - frac)
    np.add.at(R, (np.arange(out_size), hi), frac)
    return jnp.asarray(R)


def upsample_bilinear(x, size):
    """NHWC align_corners=True bilinear upsample as separable matmuls.
    # TODO(synk): kept as XLA glue for the tiny decoder skip upsamples; the
    # large final upsample goes through the Pallas NCHW kernel above."""
    N, H, W, C = x.shape
    Ho, Wo = size
    if (H, W) == (Ho, Wo):
        return x
    ry = _interp_matrix(H, Ho)
    rx = _interp_matrix(W, Wo)
    t = jnp.einsum('ph,nhwc->npwc', ry, x)
    return jnp.einsum('qw,npwc->npqc', rx, t)


# ----------------------------------------------------------------------------
# Parameter init (deterministic, synthetic)
# ----------------------------------------------------------------------------
def init_conv(key, kh, kw, cin, cout, scale=0.1):
    kw_, kb = jax.random.split(key)
    return {
        "w": scale * jax.random.normal(kw_, (kh, kw, cin, cout), jnp.float32),
        "b": scale * jax.random.normal(kb, (cout,), jnp.float32),
    }


def init_bn(key, c):
    k1, k2, k3, k4 = jax.random.split(key, 4)
    return {
        "gamma": 1.0 + 0.1 * jax.random.normal(k1, (c,), jnp.float32),
        "beta": 0.1 * jax.random.normal(k2, (c,), jnp.float32),
        "mean": 0.1 * jax.random.normal(k3, (c,), jnp.float32),
        "var": jax.random.uniform(k4, (c,), jnp.float32, minval=0.5, maxval=1.5),
    }


def init_resblock(key, cin, cout, k, first_layer):
    keys = jax.random.split(key, 6)
    return {
        "conv1": init_conv(keys[0], k, k, cin, cout),
        "bn1": init_bn(keys[1], cout if first_layer else cin),
        "conv2": init_conv(keys[2], k, k, cout, cout),
        "bn2": init_bn(keys[3], cout),
        "sc_conv": init_conv(keys[4], 1, 1, cin, cout),
        "sc_bn": init_bn(keys[5], cout),
    }


def init_resunet(key, num_filters, kernel_size, out_dim):
    n_blocks = 2 * len(num_filters) - 1
    keys = jax.random.split(key, n_blocks)
    ki = 0
    params = {"encoder": [], "decoder": []}
    params["encoder"].append(
        init_resblock(keys[ki], num_filters[0], num_filters[1], kernel_size, True)); ki += 1
    for i in range(1, len(num_filters) - 1):
        params["encoder"].append(
            init_resblock(keys[ki], num_filters[i], num_filters[i + 1], kernel_size, False)); ki += 1
    params["bridge"] = init_resblock(
        keys[ki], num_filters[-1], num_filters[-1], kernel_size, False); ki += 1
    for i in range(1, len(num_filters) - 1):
        params["decoder"].append(
            init_resblock(keys[ki], num_filters[-i] * 2, num_filters[-i - 1], kernel_size, False)); ki += 1
    params["output"] = init_conv(keys[ki], 1, 1, num_filters[1], out_dim)
    return params


# ----------------------------------------------------------------------------
# Forward pass
# ----------------------------------------------------------------------------
def bn_fold(bn, eps=1e-5):
    scale = bn["gamma"] / jnp.sqrt(bn["var"] + eps)
    shift = bn["beta"] - bn["mean"] * scale
    return scale, shift


def resblock_forward(p, x, k, stride, first_layer):
    pad = k // 2
    sc_s, sc_t = bn_fold(p["sc_bn"])
    # shortcut: 1x1 conv (stride) with fused BN epilogue
    s = conv2d_fused(x, p["sc_conv"]["w"], p["sc_conv"]["b"], stride, 0,
                     epi_scale=sc_s, epi_shift=sc_t, epi_relu=False)
    if first_layer:
        # h = conv1(x); h = BN1+ReLU(h); h = conv2(h); out = h + s
        b1s, b1t = bn_fold(p["bn1"])
        h = conv2d_fused(x, p["conv1"]["w"], p["conv1"]["b"], stride, pad,
                         epi_scale=b1s, epi_shift=b1t, epi_relu=True)
        out = conv2d_fused(h, p["conv2"]["w"], p["conv2"]["b"], 1, pad,
                           residual=s)
    else:
        # h = BN1+ReLU(x); h = conv1(h); h = BN2+ReLU(h); h = conv2(h); out = h+s
        b1s, b1t = bn_fold(p["bn1"])
        b2s, b2t = bn_fold(p["bn2"])
        xa = preact_bn_relu(x, b1s, b1t)           # must be zero-padded AFTER act
        h = conv2d_fused(xa, p["conv1"]["w"], p["conv1"]["b"], stride, pad,
                         epi_scale=b2s, epi_shift=b2t, epi_relu=True)
        out = conv2d_fused(h, p["conv2"]["w"], p["conv2"]["b"], 1, pad,
                           residual=s)
    return out


def resunet_forward(params, x_nchw, kernel_size):
    x = jnp.transpose(x_nchw, (0, 2, 3, 1)).astype(jnp.float32)   # NCHW -> NHWC
    skips = []
    out = x
    for i, p in enumerate(params["encoder"]):
        stride = 1 if i == 0 else 2
        out = resblock_forward(p, out, kernel_size, stride, first_layer=(i == 0))
        skips.append(out)
    out = resblock_forward(params["bridge"], out, kernel_size, 1, False)
    for p, skip in zip(params["decoder"], reversed(skips)):
        out = upsample_bilinear(out, (skip.shape[1], skip.shape[2]))
        out = jnp.concatenate([out, skip], axis=-1)     # == torch.cat(dim=1)
        out = resblock_forward(p, out, kernel_size, 1, False)
    # The trailing 1x1 conv commutes exactly with bilinear upsampling
    # (interpolation weights sum to 1), so apply it at low resolution and
    # upsample straight into NCHW (lane-dense 128-wide stores).
    y = conv2d_fused(out, params["output"]["w"], params["output"]["b"], 1, 0)
    y = jnp.transpose(y, (0, 3, 1, 2))                  # tiny NHWC -> NCHW
    return upsample_nchw_pallas(y, (128, 128))          # (N, out_dim, 128, 128)


# ----------------------------------------------------------------------------
if __name__ == "__main__":
    num_filters = [3, 8, 16, 32]   # num_filters[0] = input channels
    kernel_size = 3
    out_dim = 2

    key = jax.random.PRNGKey(0)
    pkey, xkey = jax.random.split(key)
    params = init_resunet(pkey, num_filters, kernel_size, out_dim)

    # NCHW input (PyTorch convention), small spatial size.
    x = jax.random.normal(xkey, (2, num_filters[0], 16, 16), jnp.float32)

    # sanity check: fused conv kernel (conv + BN affine + ReLU + residual)
    ks = jax.random.split(jax.random.PRNGKey(1), 6)
    xs = jax.random.normal(ks[0], (2, 9, 9, 5), jnp.float32)
    ws = jax.random.normal(ks[1], (3, 3, 5, 7), jnp.float32)
    bs = jax.random.normal(ks[2], (7,), jnp.float32)
    sc = jax.random.normal(ks[3], (7,), jnp.float32)
    sh = jax.random.normal(ks[4], (7,), jnp.float32)
    rs = jax.random.normal(ks[5], (2, 5, 5, 7), jnp.float32)
    ref = jax.lax.conv_general_dilated(
        xs, ws, window_strides=(2, 2), padding=[(1, 1), (1, 1)],
        dimension_numbers=("NHWC", "HWIO", "NHWC")) + bs
    ref = jnp.maximum(ref * sc + sh, 0.0) + rs
    got = conv2d_fused(xs, ws, bs, stride=2, padding=1, epi_scale=sc,
                       epi_shift=sh, epi_relu=True, residual=rs)
    assert jnp.allclose(got, ref, atol=1e-3, rtol=1e-3), "conv kernel mismatch"

    # sanity check: Pallas separable upsample vs reference separable matmuls
    yt = jax.random.normal(jax.random.PRNGKey(2), (2, 3, 8, 4), jnp.float32)
    up_p = upsample_nchw_pallas(yt, (128, 128))
    up_r = jnp.transpose(
        upsample_bilinear(jnp.transpose(yt, (0, 2, 3, 1)), (128, 128)),
        (0, 3, 1, 2))
    assert jnp.allclose(up_p, up_r, atol=1e-4, rtol=1e-4), "upsample mismatch"

    fwd = jax.jit(functools.partial(resunet_forward, kernel_size=kernel_size))
    y = fwd(params, x)
    jax.block_until_ready(y)
    assert y.shape == (2, out_dim, 128, 128), y.shape
    print("KERNEL_OK")
</pallas_src>

<mosaic_0001>
module attributes {stable_mosaic.version = 11 : i64} {
  func.func @_conv_fused_kernel(%arg0: i32, %arg1: memref<1x25x45xf32, #tpu.memory_space<vmem>>, %arg2: memref<45x7xf32, #tpu.memory_space<vmem>>, %arg3: memref<1x7xf32, #tpu.memory_space<vmem>>, %arg4: memref<1x7xf32, #tpu.memory_space<vmem>>, %arg5: memref<1x7xf32, #tpu.memory_space<vmem>>, %arg6: memref<1x25x7xf32, #tpu.memory_space<vmem>>, %arg7: memref<1x25x7xf32, #tpu.memory_space<vmem>>) attributes {dimension_semantics = [#tpu.dimension_semantics<parallel>], iteration_bounds = array<i64: 2>, scalar_prefetch = 0 : i64, scratch_operands = 0 : i64, tpu.core_type = #tpu.core_type<tc>, window_params = [{transform_indices = @transform_0, window_bounds = array<i64: 1, 25, 45>}, {pipeline_mode = #tpu.pipeline_mode<synchronous>, transform_indices = @transform_1, window_bounds = array<i64: 45, 7>}, {pipeline_mode = #tpu.pipeline_mode<synchronous>, transform_indices = @transform_2, window_bounds = array<i64: 1, 7>}, {pipeline_mode = #tpu.pipeline_mode<synchronous>, transform_indices = @transform_3, window_bounds = array<i64: 1, 7>}, {pipeline_mode = #tpu.pipeline_mode<synchronous>, transform_indices = @transform_4, window_bounds = array<i64: 1, 7>}, {transform_indices = @transform_5, window_bounds = array<i64: 1, 25, 7>}, {transform_indices = @transform_6, window_bounds = array<i64: 1, 25, 7>}]} {
    %c0 = arith.constant 0 : index
    %c0_0 = arith.constant 0 : index
    %c0_1 = arith.constant 0 : index
    %0 = vector.load %arg1[%c0, %c0_0, %c0_1] : memref<1x25x45xf32, #tpu.memory_space<vmem>>, vector<1x25x45xf32>
    %1 = vector.shape_cast %0 : vector<1x25x45xf32> to vector<25x45xf32>
    %c0_2 = arith.constant 0 : index
    %c0_3 = arith.constant 0 : index
    %2 = vector.load %arg2[%c0_2, %c0_3] : memref<45x7xf32, #tpu.memory_space<vmem>>, vector<45x7xf32>
    %cst = arith.constant dense<0.000000e+00> : vector<25x7xf32>
    %3 = tpu.matmul %1, %2, %cst {dimension_numbers = #tpu.dot_dimension_numbers<[1], [0], [0], [1], [0, 0, 1, 1], [], []>} : vector<25x45xf32>, vector<45x7xf32>, vector<25x7xf32> -> vector<25x7xf32>
    %c0_4 = arith.constant 0 : index
    %c0_5 = arith.constant 0 : index
    %4 = vector.load %arg3[%c0_4, %c0_5] : memref<1x7xf32, #tpu.memory_space<vmem>>, vector<1x7xf32>
    %5 = vector.shape_cast %4 : vector<1x7xf32> to vector<7xf32>
    %6 = vector.shape_cast %5 : vector<7xf32> to vector<1x7xf32>
    %7 = vector.broadcast %6 : vector<1x7xf32> to vector<25x7xf32>
    %8 = arith.addf %3, %7 : vector<25x7xf32>
    %c0_6 = arith.constant 0 : index
    %c0_7 = arith.constant 0 : index
    %9 = vector.load %arg4[%c0_6, %c0_7] : memref<1x7xf32, #tpu.memory_space<vmem>>, vector<1x7xf32>
    %10 = vector.shape_cast %9 : vector<1x7xf32> to vector<7xf32>
    %11 = vector.shape_cast %10 : vector<7xf32> to vector<1x7xf32>
    %12 = vector.broadcast %11 : vector<1x7xf32> to vector<25x7xf32>
    %13 = arith.mulf %8, %12 : vector<25x7xf32>
    %c0_8 = arith.constant 0 : index
    %c0_9 = arith.constant 0 : index
    %14 = vector.load %arg5[%c0_8, %c0_9] : memref<1x7xf32, #tpu.memory_space<vmem>>, vector<1x7xf32>
    %15 = vector.shape_cast %14 : vector<1x7xf32> to vector<7xf32>
    %16 = vector.shape_cast %15 : vector<7xf32> to vector<1x7xf32>
    %17 = vector.broadcast %16 : vector<1x7xf32> to vector<25x7xf32>
    %18 = arith.addf %13, %17 : vector<25x7xf32>
    %cst_10 = arith.constant 0.000000e+00 : f32
    %19 = vector.broadcast %cst_10 : f32 to vector<25x7xf32>
    %20 = arith.maximumf %18, %19 : vector<25x7xf32>
    %c0_11 = arith.constant 0 : index
    %c0_12 = arith.constant 0 : index
    %c0_13 = arith.constant 0 : index
    %21 = vector.load %arg6[%c0_11, %c0_12, %c0_13] : memref<1x25x7xf32, #tpu.memory_space<vmem>>, vector<1x25x7xf32>
    %22 = vector.shape_cast %21 : vector<1x25x7xf32> to vector<25x7xf32>
    %23 = arith.addf %20, %22 : vector<25x7xf32>
    %c0_14 = arith.constant 0 : index
    %c0_15 = arith.constant 0 : index
    %c0_16 = arith.constant 0 : index
    %24 = vector.load %arg7[%c0_14, %c0_15, %c0_16] : memref<1x25x7xf32, #tpu.memory_space<vmem>>, vector<1x25x7xf32>
    %25 = vector.shape_cast %24 : vector<1x25x7xf32> to vector<25x7xf32>
    %26 = vector.shape_cast %23 : vector<25x7xf32> to vector<1x25x7xf32>
    tpu.vector_store %arg7[%c0_14, %c0_15, %c0_16], %26 {strides = array<i32>} : memref<1x25x7xf32, #tpu.memory_space<vmem>>, vector<1x25x7xf32>,
    return
  }
  func.func @transform_0(%arg0: i32) -> (i32, i32, i32) {
    %c0_i32 = arith.constant 0 : i32
    %c0_i32_0 = arith.constant 0 : i32
    %c0_i32_1 = arith.constant 0 : i32
    return %arg0, %c0_i32, %c0_i32_0 : i32, i32, i32
  }
  func.func @transform_1(%arg0: i32) -> (i32, i32) {
    %c0_i32 = arith.constant 0 : i32
    %c0_i32_0 = arith.constant 0 : i32
    %c0_i32_1 = arith.constant 0 : i32
    return %c0_i32, %c0_i32_0 : i32, i32
  }
  func.func @transform_2(%arg0: i32) -> (i32, i32) {
    %c0_i32 = arith.constant 0 : i32
    %c0_i32_0 = arith.constant 0 : i32
    %c0_i32_1 = arith.constant 0 : i32
    return %c0_i32, %c0_i32_0 : i32, i32
  }
  func.func @transform_3(%arg0: i32) -> (i32, i32) {
    %c0_i32 = arith.constant 0 : i32
    %c0_i32_0 = arith.constant 0 : i32
    %c0_i32_1 = arith.constant 0 : i32
    return %c0_i32, %c0_i32_0 : i32, i32
  }
  func.func @transform_4(%arg0: i32) -> (i32, i32) {
    %c0_i32 = arith.constant 0 : i32
    %c0_i32_0 = arith.constant 0 : i32
    %c0_i32_1 = arith.constant 0 : i32
    return %c0_i32, %c0_i32_0 : i32, i32
  }
  func.func @transform_5(%arg0: i32) -> (i32, i32, i32) {
    %c0_i32 = arith.constant 0 : i32
    %c0_i32_0 = arith.constant 0 : i32
    %c0_i32_1 = arith.constant 0 : i32
    return %arg0, %c0_i32, %c0_i32_0 : i32, i32, i32
  }
  func.func @transform_6(%arg0: i32) -> (i32, i32, i32) {
    %c0_i32 = arith.constant 0 : i32
    %c0_i32_0 = arith.constant 0 : i32
    %c0_i32_1 = arith.constant 0 : i32
    return %arg0, %c0_i32, %c0_i32_0 : i32, i32, i32
  }
}

</mosaic_0001>

<llo_original>
// kernel: tpu_custom_call.1
$region0: #{tpu_custom_call.1}
  #allocation0 [shape = 'u32[]', space=smem, size = 0x4, offset = 0x4, fixed_abs, tag = 'smem constant byte address 0x4 - core index']
  #allocation1 [shape = 'u32[144,128]{1,0:T(1,128)}', space=vmem, size = 0x12000, scoped, tag = 'internal scratch']
  %s0 = inlined_call_operand.vmem [shape: f32[2,25,45], index: 0, kind: input, shape index: {}]
  %s1 = inlined_call_operand.vmem [shape: f32[45,7], index: 1, kind: input, shape index: {}]
  %s2 = inlined_call_operand.vmem [shape: f32[1,7], index: 2, kind: input, shape index: {}]
  %s3 = inlined_call_operand.vmem [shape: f32[1,7], index: 3, kind: input, shape index: {}]
  %s4 = inlined_call_operand.vmem [shape: f32[1,7], index: 4, kind: input, shape index: {}]
  %s5 = inlined_call_operand.vmem [shape: f32[2,25,7], index: 5, kind: input, shape index: {}]
  %s6 = inlined_call_operand.vmem [shape: f32[2,25,7], index: 6, kind: output, shape index: {}]
  %s7 = sld [smem:[#allocation0]]
  $region57: #{tpu_custom_call.1} parent=0
    _
  %s9 = ssub.s32 1, %s7
  %s10 = scalar_select 0, %s9, %s7
  loop: start=0, step=1, limit=4
  $region2: #{tpu_custom_call.1} parent=0 // loop_pre_header
    _
  $region3: #{tpu_custom_call.1} parent=0 // loop_header
    %s12 = sphi 0, %s16
    %p13 = scmp.ge.s32.totalorder %s12, 4
    %s22 = sphi 0, %s24
    %s25 = sphi 0, %s22
    %s26 = sphi 0, %s25
    %s42 = sphi 0, %s26
    %s46 = sphi 0, %s46
    %s48 = sphi 0, %s46
    %s49 = sphi 0, %s48
    %s63 = sphi 0, %s49
    %s67 = sphi 0, %s67
    %s69 = sphi 0, %s67
    %s70 = sphi 0, %s69
    %s84 = sphi 0, %s70
    %s88 = sphi 0, %s88
    %s90 = sphi 0, %s88
    %s91 = sphi 0, %s90
    %s105 = sphi 0, %s91
    %s109 = sphi 0, %s109
    %s111 = sphi 0, %s109
    %s112 = sphi 0, %s111
    %s126 = sphi 0, %s112
    %s132 = sphi 0, %s134
    %s135 = sphi 0, %s132
    %s136 = sphi 0, %s135
    %s152 = sphi 0, %s136
    %s158 = sphi 0, %s160
    %s161 = sphi 0, %s158
    %s162 = sphi 0, %s161
    %s178 = sphi 0, %s162
  $region4: #{tpu_custom_call.1} parent=0 // loop_header_branch
    %15 = sbr.rel (%p13) target = $region8
  $region5: #{tpu_custom_call.1} parent=0 // loop_body
    %s17 = ssub.s32 %s12, 1
    %s18 = ssub.s32 %s12, 2
    %s19 = sadd.s32 %s12, 1
    %s20 = ssub.s32 %s12, %s19
    %p21 = scmp.eq.s32.totalorder %s20, 0
    %s23 = sadd.s32 %s22, 1
    %s24 = scalar_select %p21, %s22, %s23
    %p27 = pneg %p21
    %p28 = scmp.eq.s32.totalorder %s12, 1
    %p29 = por %p27, %p28
    %p30 = scmp.ne.s32.totalorder %s22, %s25
    %p31 = scmp.eq.s32.totalorder %s12, 0
    %p32 = por %p30, %p31
    %p33 = scmp.ne.s32.totalorder %s22, %s25
    %p34 = scmp.eq.s32.totalorder %s17, 1
    %p35 = por %p33, %p34
    %p36 = scmp.ne.s32.totalorder %s25, %s26
    %p37 = scmp.eq.s32.totalorder %s17, 0
    %p38 = por %p36, %p37
    %p39 = scmp.ne.s32.totalorder %s25, %s26
    %p40 = scmp.eq.s32.totalorder %s18, 1
    %p41 = por %p39, %p40
    %p43 = scmp.ne.s32.totalorder %s26, %s42
    %p44 = scmp.eq.s32.totalorder %s18, 0
    %p45 = por %p43, %p44
    %s47 = sadd.s32 %s46, 1
    %p50 = scmp.eq.s32.totalorder %s12, 1
    %p51 = scmp.ne.s32.totalorder %s46, %s48
    %p52 = scmp.eq.s32.totalorder %s12, 0
    %p53 = por %p51, %p52
    %p54 = scmp.ne.s32.totalorder %s46, %s48
    %p55 = scmp.eq.s32.totalorder %s17, 1
    %p56 = por %p54, %p55
    %p57 = scmp.ne.s32.totalorder %s48, %s49
    %p58 = scmp.eq.s32.totalorder %s17, 0
    %p59 = por %p57, %p58
    %p60 = scmp.ne.s32.totalorder %s48, %s49
    %p61 = scmp.eq.s32.totalorder %s18, 1
    %p62 = por %p60, %p61
    %p64 = scmp.ne.s32.totalorder %s49, %s63
    %p65 = scmp.eq.s32.totalorder %s18, 0
    %p66 = por %p64, %p65
    %s68 = sadd.s32 %s67, 1
    %p71 = scmp.eq.s32.totalorder %s12, 1
    %p72 = scmp.ne.s32.totalorder %s67, %s69
    %p73 = scmp.eq.s32.totalorder %s12, 0
    %p74 = por %p72, %p73
    %p75 = scmp.ne.s32.totalorder %s67, %s69
    %p76 = scmp.eq.s32.totalorder %s17, 1
    %p77 = por %p75, %p76
    %p78 = scmp.ne.s32.totalorder %s69, %s70
    %p79 = scmp.eq.s32.totalorder %s17, 0
    %p80 = por %p78, %p79
    %p81 = scmp.ne.s32.totalorder %s69, %s70
    %p82 = scmp.eq.s32.totalorder %s18, 1
    %p83 = por %p81, %p82
    %p85 = scmp.ne.s32.totalorder %s70, %s84
    %p86 = scmp.eq.s32.totalorder %s18, 0
    %p87 = por %p85, %p86
    %s89 = sadd.s32 %s88, 1
    %p92 = scmp.eq.s32.totalorder %s12, 1
    %p93 = scmp.ne.s32.totalorder %s88, %s90
    %p94 = scmp.eq.s32.totalorder %s12, 0
    %p95 = por %p93, %p94
    %p96 = scmp.ne.s32.totalorder %s88, %s90
    %p97 = scmp.eq.s32.totalorder %s17, 1
    %p98 = por %p96, %p97
    %p99 = scmp.ne.s32.totalorder %s90, %s91
    %p100 = scmp.eq.s32.totalorder %s17, 0
    %p101 = por %p99, %p100
    %p102 = scmp.ne.s32.totalorder %s90, %s91
    %p103 = scmp.eq.s32.totalorder %s18, 1
    %p104 = por %p102, %p103
    %p106 = scmp.ne.s32.totalorder %s91, %s105
    %p107 = scmp.eq.s32.totalorder %s18, 0
    %p108 = por %p106, %p107
    %s110 = sadd.s32 %s109, 1
    %p113 = scmp.eq.s32.totalorder %s12, 1
    %p114 = scmp.ne.s32.totalorder %s109, %s111
    %p115 = scmp.eq.s32.totalorder %s12, 0
    %p116 = por %p114, %p115
    %p117 = scmp.ne.s32.totalorder %s109, %s111
    %p118 = scmp.eq.s32.totalorder %s17, 1
    %p119 = por %p117, %p118
    %p120 = scmp.ne.s32.totalorder %s111, %s112
    %p121 = scmp.eq.s32.totalorder %s17, 0
    %p122 = por %p120, %p121
    %p123 = scmp.ne.s32.totalorder %s111, %s112
    %p124 = scmp.eq.s32.totalorder %s18, 1
    %p125 = por %p123, %p124
    %p127 = scmp.ne.s32.totalorder %s112, %s126
    %p128 = scmp.eq.s32.totalorder %s18, 0
    %p129 = por %p127, %p128
    %s130 = ssub.s32 %s12, %s19
    %p131 = scmp.eq.s32.totalorder %s130, 0
    %s133 = sadd.s32 %s132, 1
    %s134 = scalar_select %p131, %s132, %s133
    %p137 = pneg %p131
    %p138 = scmp.eq.s32.totalorder %s12, 1
    %p139 = por %p137, %p138
    %p140 = scmp.ne.s32.totalorder %s132, %s135
    %p141 = scmp.eq.s32.totalorder %s12, 0
    %p142 = por %p140, %p141
    %p143 = scmp.ne.s32.totalorder %s132, %s135
    %p144 = scmp.eq.s32.totalorder %s17, 1
    %p145 = por %p143, %p144
    %p146 = scmp.ne.s32.totalorder %s135, %s136
    %p147 = scmp.eq.s32.totalorder %s17, 0
    %p148 = por %p146, %p147
    %p149 = scmp.ne.s32.totalorder %s135, %s136
    %p150 = scmp.eq.s32.totalorder %s18, 1
    %p151 = por %p149, %p150
    %p153 = scmp.ne.s32.totalorder %s136, %s152
    %p154 = scmp.eq.s32.totalorder %s18, 0
    %p155 = por %p153, %p154
    %s156 = ssub.s32 %s12, %s19
    %p157 = scmp.eq.s32.totalorder %s156, 0
    %s159 = sadd.s32 %s158, 1
    %s160 = scalar_select %p157, %s158, %s159
    %p163 = pneg %p157
    %p164 = scmp.eq.s32.totalorder %s12, 1
    %p165 = por %p163, %p164
    %p166 = scmp.ne.s32.totalorder %s158, %s161
    %p167 = scmp.eq.s32.totalorder %s12, 0
    %p168 = por %p166, %p167
    %p169 = scmp.ne.s32.totalorder %s158, %s161
    %p170 = scmp.eq.s32.totalorder %s17, 1
    %p171 = por %p169, %p170
    %p172 = scmp.ne.s32.totalorder %s161, %s162
    %p173 = scmp.eq.s32.totalorder %s17, 0
    %p174 = por %p172, %p173
    %p175 = scmp.ne.s32.totalorder %s161, %s162
    %p176 = scmp.eq.s32.totalorder %s18, 1
    %p177 = por %p175, %p176
    %p179 = scmp.ne.s32.totalorder %s162, %s178
    %p180 = scmp.eq.s32.totalorder %s18, 0
    %p181 = por %p179, %p180
    %p182 = scmp.le.s32.totalorder 1, %s12
    %p183 = scmp.lt.s32.totalorder %s12, 3
    %p184 = pnand %p182, %p183
    %p185 = pneg %p184
    // Predicated region
    $region9: #{tpu_custom_call.1} parent=5 // pred_check
      _
    $region10: #{tpu_custom_call.1} parent=5 // pred_check_branch
      %187 = sbr.rel (%p184) target = $region12
    $region11: #{tpu_custom_call.1} parent=5 // pred_region
      %s188 = ssub.s32 %s12, 1
      // Predicated region
      $region13: #{tpu_custom_call.1} parent=11 // pred_check
        %p189 = pneg %p59
      $region14: #{tpu_custom_call.1} parent=11 // pred_check_branch
        %191 = sbr.rel (%p189) target = $region16
      $region15: #{tpu_custom_call.1} parent=11 // pred_region
        _
      $region16: #{tpu_custom_call.1} parent=11 // pred_fallthru
        _
      // Predicated region
      $region17: #{tpu_custom_call.1} parent=11 // pred_check
        %p192 = pneg %p80
      $region18: #{tpu_custom_call.1} parent=11 // pred_check_branch
        %194 = sbr.rel (%p192) target = $region20
      $region19: #{tpu_custom_call.1} parent=11 // pred_region
        _
      $region20: #{tpu_custom_call.1} parent=11 // pred_fallthru
        _
      // Predicated region
      $region21: #{tpu_custom_call.1} parent=11 // pred_check
        %p195 = pneg %p101
      $region22: #{tpu_custom_call.1} parent=11 // pred_check_branch
        %197 = sbr.rel (%p195) target = $region24
      $region23: #{tpu_custom_call.1} parent=11 // pred_region
        _
      $region24: #{tpu_custom_call.1} parent=11 // pred_fallthru
        _
      // Predicated region
      $region25: #{tpu_custom_call.1} parent=11 // pred_check
        %p198 = pneg %p122
      $region26: #{tpu_custom_call.1} parent=11 // pred_check_branch
        %200 = sbr.rel (%p198) target = $region28
      $region27: #{tpu_custom_call.1} parent=11 // pred_region
        _
      $region28: #{tpu_custom_call.1} parent=11 // pred_fallthru
        _
    $region12: #{tpu_custom_call.1} parent=5 // pred_fallthru
      _
    %p201 = scmp.lt.s32.totalorder %s12, 2
    // Predicated region
    $region29: #{tpu_custom_call.1} parent=5 // pred_check
      %p202 = pneg %p201
    $region30: #{tpu_custom_call.1} parent=5 // pred_check_branch
      %204 = sbr.rel (%p202) target = $region32
    $region31: #{tpu_custom_call.1} parent=5 // pred_region
      // Predicated region
      $region33: #{tpu_custom_call.1} parent=31 // pred_check
        %p205 = pneg %p32
      $region34: #{tpu_custom_call.1} parent=31 // pred_check_branch
        %207 = sbr.rel (%p205) target = $region36
      $region35: #{tpu_custom_call.1} parent=31 // pred_region
        %p208 = scmp.lt.s32.totalorder %s12, 1
        %s209 = scalar_select %p208, %s12, 1
        %s210 = smul.addr %s209, 4
        %s211 = smul.addr %s210, 8
        %s212 = scalar_lea.vmem %s0, %s211
      $region36: #{tpu_custom_call.1} parent=31 // pred_fallthru
        _
      // Predicated region
      $region37: #{tpu_custom_call.1} parent=31 // pred_check
        %p213 = pneg %p142
      $region38: #{tpu_custom_call.1} parent=31 // pred_check_branch
        %215 = sbr.rel (%p213) target = $region40
      $region39: #{tpu_custom_call.1} parent=31 // pred_region
        %p216 = scmp.lt.s32.totalorder %s12, 1
        %s217 = scalar_select %p216, %s12, 1
        %s218 = smul.addr %s217, 4
        %s219 = smul.addr %s218, 8
        %s220 = scalar_lea.vmem %s5, %s219
      $region40: #{tpu_custom_call.1} parent=31 // pred_fallthru
        _
    $region32: #{tpu_custom_call.1} parent=5 // pred_fallthru
      _
    %p221 = scmp.le.s32.totalorder 1, %s12
    %p222 = scmp.lt.s32.totalorder %s12, 3
    %p223 = pnand %p221, %p222
    %p224 = pneg %p223
    // Predicated region
    $region41: #{tpu_custom_call.1} parent=5 // pred_check
      _
    $region42: #{tpu_custom_call.1} parent=5 // pred_check_branch
      %226 = sbr.rel (%p223) target = $region44
    $region43: #{tpu_custom_call.1} parent=5 // pred_region
      %s227 = ssub.s32 %s12, 1
      %p228 = scmp.lt.s32.totalorder %s17, 1
      %s229 = scalar_select %p228, %s17, 1
      %s230 = smul.addr %s229, 4
      %s231 = smul.addr %s230, 8
      %s232 = scalar_lea.vmem %s0, %s231
      %p233 = pneg %p38
      %p234 = pneg %p35
      %p235 = pneg %p59
      %p236 = pneg %p56
      %p237 = pneg %p80
      %p238 = pneg %p77
      %p239 = pneg %p101
      %p240 = pneg %p98
      %p241 = pneg %p122
      %p242 = pneg %p119
      %p243 = scmp.lt.s32.totalorder %s17, 1
      %s244 = scalar_select %p243, %s17, 1
      %s245 = smul.addr %s244, 4
      %s246 = smul.addr %s245, 8
      %s247 = scalar_lea.vmem %s5, %s246
      %p248 = pneg %p148
      %p249 = pneg %p145
      %p250 = pneg %p174
      %p251 = pneg %p171
      %p252 = scmp.lt.s32.totalorder %s17, 1
      %s253 = scalar_select %p252, %s17, 1
      %s254 = smul.addr %s253, 4
      %s255 = smul.addr %s254, 8
      %s256 = scalar_lea.vmem %s6, %s255
      %p257 = scmp.lt.s32.totalorder %s17, 1
      %s258 = scalar_select %p257, %s17, 1
      %s259 = smul.addr %s258, 4
      %s260 = smul.addr %s259, 8
      %s261 = scalar_lea.vmem %s0, %s260
      %p262 = scmp.lt.s32.totalorder %s17, 1
      %s263 = scalar_select %p262, %s17, 1
      %s264 = smul.addr %s263, 4
      %s265 = smul.addr %s264, 8
      %s266 = scalar_lea.vmem %s5, %s265
      %p267 = scmp.lt.s32.totalorder %s17, 1
      %s268 = scalar_select %p267, %s17, 1
      %s269 = smul.addr %s268, 4
      %s270 = smul.addr %s269, 8
      %s271 = scalar_lea.vmem %s6, %s270
      %v272 = vld [vmem:[%s261] sm:$0xff]
      %v273 = vld [vmem:[%s261 + $0x8] sm:$0xff]
      %v274 = vld [vmem:[%s261 + $0x10] sm:$0xff]
      %v275 = vld [vmem:[%s261 + $0x18] sm:$0x1]
      %v276 = vld [vmem:[%s1] sm:$0xff]
      %v277 = vld [vmem:[%s1 + $0x8] sm:$0xff]
      %v278 = vld [vmem:[%s1 + $0x10] sm:$0xff]
      %v279 = vld [vmem:[%s1 + $0x18] sm:$0xff]
      %v280 = vld [vmem:[%s1 + $0x20] sm:$0xff]
      %v281 = vld [vmem:[%s1 + $0x28] sm:$0x1f]
      %v282 = vld [vmem:[%s2] sm:$0x1]
      %v284 = vlaneseq
      %v285 = vshrl.u32 %v284, 7
      %v286 = vsub.s32 0, %v285
      %v287 = vrot.slane %v282, %v286
      %vm289 = vcmask 367616
      %v291 = vsel %vm289, %v272, 0
      %v294 = vsel %vm289, %v273, 0
      %v297 = vsel %vm289, %v274, 0
      %v300 = vsel %vm289, %v275, 0
      %vm302 = vcmask 1044480
      %v304 = vsel %vm302, %v281, 0
      %306 = vmatprep.subr.mxu0 0.0
      %307 = vmatpush1.msra.mxu0 %v276
      %308 = vmatprep.subr.mxu0 0.0
      %309 = vmatpush1.msra.mxu0 %v277
      %310 = vmatprep.subr.mxu0 0.0
      %311 = vmatpush1.msra.mxu0 %v278
      %312 = vmatprep.subr.mxu0 0.0
      %313 = vmatpush1.msra.mxu0 %v279
      %314 = vmatprep.subr.mxu0 0.0
      %315 = vmatpush1.msra.mxu0 %v280
      %316 = vmatprep.subr.mxu0 0.0
      %317 = vmatpush1.msra.mxu0 %v304
      %318 = vmatprep.subr.mxu0 0.0
      %319 = vmatpush1.msra.mxu0 0.0
      %320 = vmatprep.subr.mxu0 0.0
      %321 = vmatpush1.msra.mxu0 0.0
      %322 = vmatprep.subr.mxu0 0.0
      %323 = vmatpush1.msra.mxu0 0.0
      %324 = vmatprep.subr.mxu0 0.0
      %325 = vmatpush1.msra.mxu0 0.0
      %326 = vmatprep.subr.mxu0 0.0
      %327 = vmatpush1.msra.mxu0 0.0
      %328 = vmatprep.subr.mxu0 0.0
      %329 = vmatpush1.msra.mxu0 0.0
      %330 = vmatprep.subr.mxu0 0.0
      %331 = vmatpush1.msra.mxu0 0.0
      %332 = vmatprep.subr.mxu0 0.0
      %333 = vmatpush1.msra.mxu0 0.0
      %334 = vmatprep.subr.mxu0 0.0
      %335 = vmatpush1.msra.mxu0 0.0
      %336 = vmatprep.subr.mxu0 0.0
      %337 = vmatpush1.msra.mxu0 0.0
      %338 = vmatprep.subr.mxu0 0.0
      %339 = vmatpush1.msra.mxu0 0.0
      %340 = vmatprep.subr.mxu0 0.0
      %341 = vmatpush1.msra.mxu0 0.0
      %342 = vmatprep.subr.mxu0 0.0
      %343 = vmatpush1.msra.mxu0 0.0
      %344 = vmatprep.subr.mxu0 0.0
      %345 = vmatpush1.msra.mxu0 0.0
      %346 = vmatprep.subr.mxu0 0.0
      %347 = vmatpush1.msra.mxu0 0.0
      %348 = vmatprep.subr.mxu0 0.0
      %349 = vmatpush1.msra.mxu0 0.0
      %350 = vmatprep.subr.mxu0 0.0
      %351 = vmatpush1.msra.mxu0 0.0
      %352 = vmatprep.subr.mxu0 0.0
      %353 = vmatpush1.msra.mxu0 0.0
      %354 = vmatprep.subr.mxu0 0.0
      %355 = vmatpush1.msra.mxu0 0.0
      %356 = vmatprep.subr.mxu0 0.0
      %357 = vmatpush1.msra.mxu0 0.0
      %358 = vmatprep.subr.mxu0 0.0
      %359 = vmatpush1.msra.mxu0 0.0
      %360 = vmatprep.subr.mxu0 0.0
      %361 = vmatpush1.msra.mxu0 0.0
      %362 = vmatprep.subr.mxu0 0.0
      %363 = vmatpush1.msra.mxu0 0.0
      %364 = vmatprep.subr.mxu0 0.0
      %365 = vmatpush1.msra.mxu0 0.0
      %366 = vmatprep.subr.mxu0 0.0
      %367 = vmatpush1.msra.mxu0 0.0
      %368 = vmatprep.subr.mxu0 0.0
      %369 = vmatpush1.msra.mxu0 0.0
      %370 = vmatprep.mubr.f32.mxu0 0.0
      %371 = vmatmul.mubr.f32.gmra.mrb[0].mxu0 %v291
      %v372 = vpop.f32.mrb[0].mxu0
      %v373 = vadd.f32 %v287, %v372
      %v374 = vpop.f32.mrb[0].mxu0
      %375 = vmatprep.mubr.f32.mxu0 0.0
      %376 = vmatmul.mubr.f32.gmra.mrb[0].mxu0 %v294
      %v377 = vpop.f32.mrb[0].mxu0
      %v378 = vadd.f32 %v287, %v377
      %v379 = vpop.f32.mrb[0].mxu0
      %380 = vmatprep.mubr.f32.mxu0 0.0
      %381 = vmatmul.mubr.f32.gmra.mrb[0].mxu0 %v297
      %v382 = vpop.f32.mrb[0].mxu0
      %v383 = vadd.f32 %v287, %v382
      %v384 = vpop.f32.mrb[0].mxu0
      %385 = vmatprep.mubr.f32.mxu0 0.0
      %386 = vmatmul.mubr.f32.gmra.mrb[0].mxu0 %v300
      %v387 = vpop.f32.mrb[0].mxu0
      %v388 = vadd.f32 %v287, %v387
      %v389 = vpop.f32.mrb[0].mxu0
      %390 = vdwg.mxu0
      %v391 = vld [vmem:[%s3] sm:$0x1]
      %v393 = vlaneseq
      %v394 = vshrl.u32 %v393, 7
      %v395 = vsub.s32 0, %v394
      %v396 = vrot.slane %v391, %v395
      %v398 = vmul.f32 %v373, %v396
      %v399 = vmul.f32 %v378, %v396
      %v400 = vmul.f32 %v383, %v396
      %v401 = vmul.f32 %v388, %v396
      %v402 = vld [vmem:[%s4] sm:$0x1]
      %v404 = vlaneseq
      %v405 = vshrl.u32 %v404, 7
      %v406 = vsub.s32 0, %v405
      %v407 = vrot.slane %v402, %v406
      %v409 = vadd.f32 %v398, %v407
      %v410 = vadd.f32 %v399, %v407
      %v411 = vadd.f32 %v400, %v407
      %v412 = vadd.f32 %v401, %v407
      %v413 = vmax.f32 %v409, 0.0
      %v414 = vmax.f32 %v410, 0.0
      %v415 = vmax.f32 %v411, 0.0
      %v416 = vmax.f32 %v412, 0.0
      %v417 = vld [vmem:[%s266] sm:$0xff]
      %v418 = vld [vmem:[%s266 + $0x8] sm:$0xff]
      %v419 = vld [vmem:[%s266 + $0x10] sm:$0xff]
      %v420 = vld [vmem:[%s266 + $0x18] sm:$0x1]
      %v421 = vadd.f32 %v413, %v417
      %v422 = vadd.f32 %v414, %v418
      %v423 = vadd.f32 %v415, %v419
      %v424 = vadd.f32 %v416, %v420
      %vm425 = vcmask 56320
      %426 = vst.msk [vmem:[%s271] sm:$0xff] %vm425, %v421
      %427 = vst.msk [vmem:[%s271 + $0x8] sm:$0xff] %vm425, %v422
      %428 = vst.msk [vmem:[%s271 + $0x10] sm:$0xff] %vm425, %v423
      %vm429 = vcmask 49152
      %430 = vst.msk [vmem:[%s271 + $0x18] sm:$0x1] %vm429, %v424
      %p431 = scmp.lt.s32.totalorder %s17, 1
      %s432 = scalar_select %p431, %s17, 1
      %s433 = smul.addr %s432, 4
      %s434 = smul.addr %s433, 8
      %s435 = scalar_lea.vmem %s6, %s434
      // Predicated region
      $region45: #{tpu_custom_call.1} parent=43 // pred_check
        %p436 = pneg %p171
      $region46: #{tpu_custom_call.1} parent=43 // pred_check_branch
        %438 = sbr.rel (%p436) target = $region48
      $region47: #{tpu_custom_call.1} parent=43 // pred_region
        _
      $region48: #{tpu_custom_call.1} parent=43 // pred_fallthru
        _
    $region44: #{tpu_custom_call.1} parent=5 // pred_fallthru
      _
    %p439 = scmp.le.s32.totalorder 2, %s12
    // Predicated region
    $region49: #{tpu_custom_call.1} parent=5 // pred_check
      %p440 = pneg %p439
    $region50: #{tpu_custom_call.1} parent=5 // pred_check_branch
      %442 = sbr.rel (%p440) target = $region52
    $region51: #{tpu_custom_call.1} parent=5 // pred_region
      %s443 = ssub.s32 %s12, 2
      // Predicated region
      $region53: #{tpu_custom_call.1} parent=51 // pred_check
        %p444 = pneg %p177
      $region54: #{tpu_custom_call.1} parent=51 // pred_check_branch
        %446 = sbr.rel (%p444) target = $region56
      $region55: #{tpu_custom_call.1} parent=51 // pred_region
        %p447 = scmp.lt.s32.totalorder %s18, 1
        %s448 = scalar_select %p447, %s18, 1
        %s449 = smul.addr %s448, 4
        %s450 = smul.addr %s449, 8
        %s451 = scalar_lea.vmem %s6, %s450
      $region56: #{tpu_custom_call.1} parent=51 // pred_fallthru
        _
    $region52: #{tpu_custom_call.1} parent=5 // pred_fallthru
      _
  $region6: #{tpu_custom_call.1} parent=0 // loop_footer
    %s16 = sadd.s32 1, %s12
  $region7: #{tpu_custom_call.1} parent=0 // loop_footer_branch
    %11 = sbr.rel target = $region3
  $region8: #{tpu_custom_call.1} parent=0 // loop_exit
    _

</llo_original>
